<compile_context>
chip_gen: v5e
topology: v5e:2x2
jax: 0.10.0
libtpu: 0.0.40
codegen_flags: <defaults>
</compile_context>

<pallas_src>
import jax
import jax.numpy as jnp
from jax.experimental import pallas as pl
from jax.experimental.pallas import tpu as pltpu

# ---- problem sizes (small, consistent with the module) ----
N, C_IN, H, W = 2, 4, 16, 16
C_OUT = 8
KH = KW = 3
HP, WP = H // 2, W // 2            # 8, 8 pooled spatial
P = HP * WP                        # 64 pooled positions per image
F = C_OUT * P                      # 512 flattened features (torch order c*P + p)
K_OUT = 10                         # linear output features
WPAD = (W + 2) * C_IN              # 72 = lanes of one padded input row (pw*4 + cin)
LCONV = 2 * WP * C_OUT             # 128 = conv output lanes (dw*64 + wp*8 + cout)


# ---------------- Pallas kernel (one image per grid step) ----------------

def flat_model_kernel(x_ref, wband_ref, bconv_ref, wfc_ref, bfc_ref, out_ref):
    """conv3x3(pad=1) + bias + ReLU + maxpool2 + flatten + Linear for one image.

    x_ref    : [1, 2, 9, 72]  padded NHWC input, rows de-interleaved:
               x_ref[0,0,i, pw*4+ci] = x_pad[2i,   pw, ci]   (even padded rows)
               x_ref[0,1,i, pw*4+ci] = x_pad[2i+1, pw, ci]   (odd  padded rows)
    wband_ref: [3, 72, 128]   banded conv weight, one slab per kh:
               wband[kh, (w+kw)*4+ci, (w%2)*64 + (w//2)*8 + co] = w_conv[co,ci,kh,kw]
    bconv_ref: [1, 64]        conv bias tiled over wp: value b_conv[co] at lane wp*8+co
    wfc_ref  : [512, 10]      fc weight reordered: wfc[hp*64 + wp*8 + co, k]
                              = w_fc[k, co*64 + hp*8 + wp]   (torch flatten order)
    bfc_ref  : [1, 10]
    out_ref  : [1, 1, 10]
    """
    f32 = jnp.float32
    x = x_ref[...]
    xe = x[0, 0]                               # [9, 72] even padded rows
    xo = x[0, 1]                               # [9, 72] odd  padded rows
    w0, w1, w2 = wband_ref[0], wband_ref[1], wband_ref[2]

    # Conv: output row h = 2*hp   reads padded rows (2hp, 2hp+1, 2hp+2) = xe[hp], xo[hp], xe[hp+1]
    #       output row h = 2*hp+1 reads padded rows (2hp+1, 2hp+2, 2hp+3) = xo[hp], xe[hp+1], xo[hp+1]
    z_even = (jnp.dot(xe[0:8], w0, preferred_element_type=f32)
              + jnp.dot(xo[0:8], w1, preferred_element_type=f32)
              + jnp.dot(xe[1:9], w2, preferred_element_type=f32))      # [8, 128]
    z_odd = (jnp.dot(xo[0:8], w0, preferred_element_type=f32)
             + jnp.dot(xe[1:9], w1, preferred_element_type=f32)
             + jnp.dot(xo[1:9], w2, preferred_element_type=f32))       # [8, 128]

    # MaxPool2d(2): dh = even/odd conv rows, dw = the two static lane halves
    # (lanes are dw*64 + wp*8 + co).  Per-channel bias and ReLU commute with the
    # max, so apply them once on the pooled [8,64] tile.
    zmax = jnp.maximum(z_even, z_odd)                                  # [8, 128]
    pooled = jnp.maximum(zmax[:, :WP * C_OUT], zmax[:, WP * C_OUT:])   # [8, 64]
    pooled = jnp.maximum(pooled + bconv_ref[...], 0.0)                 # [hp, wp*8+co]

    # flatten (torch order f = co*64 + hp*8 + wp) + Linear.  hp sits on sublanes,
    # so contract it with 8 unrolled tiny [1,64]x[64,10] dots against per-hp
    # slices of the reordered fc weight — no iota masks, no relayout.
    out = bfc_ref[...]                                                 # [1, 10]
    for hp in range(HP):
        out = out + jnp.dot(pooled[hp:hp + 1, :],
                            wfc_ref[hp * WP * C_OUT:(hp + 1) * WP * C_OUT, :],
                            preferred_element_type=f32)
    out_ref[0] = out.astype(out_ref.dtype)


# ---------------- wrapper (jitted glue) ----------------

def _prepare_inputs(x_nchw, w_conv, b_conv, w_fc, b_fc):
    # Activation-side prep is ~10 KB: pad + NHWC + even/odd row de-interleave.
    x_nhwc = jnp.transpose(x_nchw, (0, 2, 3, 1))                       # [N,16,16,4]
    x_pad = jnp.pad(x_nhwc, ((0, 0), (1, 1), (1, 1), (0, 0)))          # [N,18,18,4]
    x_pad = x_pad.reshape(N, H + 2, WPAD)                              # [N,18,72]
    x_deint = jnp.stack([x_pad[:, 0::2, :], x_pad[:, 1::2, :]], axis=1)  # [N,2,9,72]

    # Banded conv weight: wband[kh, (w+kw)*4+ci, (w%2)*64 + (w//2)*8 + co] = w_conv[co,ci,kh,kw]
    kh = jnp.arange(KH)[:, None, None, None, None]
    kw = jnp.arange(KW)[None, :, None, None, None]
    w = jnp.arange(W)[None, None, :, None, None]
    ci = jnp.arange(C_IN)[None, None, None, :, None]
    co = jnp.arange(C_OUT)[None, None, None, None, :]
    jj = (w + kw) * C_IN + ci
    cc = (w % 2) * (WP * C_OUT) + (w // 2) * C_OUT + co
    wband = jnp.zeros((KH, WPAD, LCONV), jnp.float32).at[kh, jj, cc].set(
        w_conv[co, ci, kh, kw])

    bconv = jnp.tile(b_conv, WP).reshape(1, WP * C_OUT)                # [1, 64]
    # fc weight [K_OUT, F] with f = co*64 + hp*8 + wp -> [hp*64 + wp*8 + co, k]
    wfc = jnp.transpose(w_fc.reshape(K_OUT, C_OUT, HP, WP),
                        (2, 3, 1, 0)).reshape(F, K_OUT)                # [512, 10]
    bfc = b_fc.reshape(1, K_OUT)
    return x_deint, wband, bconv, wfc, bfc


@jax.jit
def flat_model_forward(x_nchw, w_conv, b_conv, w_fc, b_fc):
    """Runs the FlatModel layer stack: conv -> relu -> pool -> flatten -> linear."""
    x_deint, wband, bconv, wfc, bfc = _prepare_inputs(
        x_nchw, w_conv, b_conv, w_fc, b_fc)

    flops = N * 2 * (6 * HP * WPAD * LCONV + HP * (WP * C_OUT) * K_OUT)
    bytes_accessed = 4 * (x_deint.size + wband.size + bconv.size
                          + wfc.size + bfc.size + N * K_OUT)

    out3 = pl.pallas_call(
        flat_model_kernel,
        out_shape=jax.ShapeDtypeStruct((N, 1, K_OUT), jnp.float32),
        grid=(N,),
        in_specs=[
            pl.BlockSpec((1, 2, HP + 1, WPAD), lambda n: (n, 0, 0, 0)),
            pl.BlockSpec((KH, WPAD, LCONV), lambda n: (0, 0, 0)),
            pl.BlockSpec((1, WP * C_OUT), lambda n: (0, 0)),
            pl.BlockSpec((F, K_OUT), lambda n: (0, 0)),
            pl.BlockSpec((1, K_OUT), lambda n: (0, 0)),
        ],
        out_specs=pl.BlockSpec((1, 1, K_OUT), lambda n: (n, 0, 0)),
        compiler_params=pltpu.CompilerParams(
            dimension_semantics=("parallel",)),
        cost_estimate=pl.CostEstimate(flops=flops, transcendentals=0,
                                      bytes_accessed=bytes_accessed),
    )(x_deint, wband, bconv, wfc, bfc)
    return out3[:, 0, :]


def reference_forward(x_nchw, w_conv, b_conv, w_fc, b_fc):
    """Plain-JAX reference (mirrors the PyTorch layer stack exactly)."""
    y = jax.lax.conv_general_dilated(
        x_nchw, w_conv, window_strides=(1, 1), padding=((1, 1), (1, 1)),
        dimension_numbers=("NCHW", "OIHW", "NCHW"))
    y = y + b_conv[None, :, None, None]
    y = jnp.maximum(y, 0.0)
    y = jax.lax.reduce_window(y, -jnp.inf, jax.lax.max,
                              (1, 1, 2, 2), (1, 1, 2, 2), "VALID")
    y = y.reshape(N, -1)
    return y @ w_fc.T + b_fc


# TODO(synk): FlatModel's hook machinery (HookDict / TensorHook) is PyTorch
# autograd bookkeeping with no forward-math effect; not represented in the kernel.

if __name__ == "__main__":
    key = jax.random.PRNGKey(0)
    k1, k2, k3, k4, k5 = jax.random.split(key, 5)
    x = jax.random.normal(k1, (N, C_IN, H, W), jnp.float32)
    w_conv = jax.random.normal(k2, (C_OUT, C_IN, KH, KW), jnp.float32) * 0.1
    b_conv = jax.random.normal(k3, (C_OUT,), jnp.float32) * 0.1
    w_fc = jax.random.normal(k4, (K_OUT, F), jnp.float32) * 0.05
    b_fc = jax.random.normal(k5, (K_OUT,), jnp.float32) * 0.1

    out = flat_model_forward(x, w_conv, b_conv, w_fc, b_fc)
    out = jax.block_until_ready(out)

    ref = reference_forward(x, w_conv, b_conv, w_fc, b_fc)
    assert out.shape == (N, K_OUT)
    assert jnp.allclose(out, ref, rtol=1e-3, atol=1e-3), (
        f"max abs diff {jnp.max(jnp.abs(out - ref))}")
    print("KERNEL_OK")
</pallas_src>

<mosaic_0001>
module attributes {stable_mosaic.version = 11 : i64} {
  func.func @flat_model_kernel(%arg0: i32, %arg1: memref<1x2x9x72xf32, #tpu.memory_space<vmem>>, %arg2: memref<3x72x128xf32, #tpu.memory_space<vmem>>, %arg3: memref<1x64xf32, #tpu.memory_space<vmem>>, %arg4: memref<512x10xf32, #tpu.memory_space<vmem>>, %arg5: memref<1x10xf32, #tpu.memory_space<vmem>>, %arg6: memref<1x1x10xf32, #tpu.memory_space<vmem>>) attributes {dimension_semantics = [#tpu.dimension_semantics<parallel>], iteration_bounds = array<i64: 2>, scalar_prefetch = 0 : i64, scratch_operands = 0 : i64, tpu.core_type = #tpu.core_type<tc>, window_params = [{transform_indices = @transform_0, window_bounds = array<i64: 1, 2, 9, 72>}, {pipeline_mode = #tpu.pipeline_mode<synchronous>, transform_indices = @transform_1, window_bounds = array<i64: 3, 72, 128>}, {pipeline_mode = #tpu.pipeline_mode<synchronous>, transform_indices = @transform_2, window_bounds = array<i64: 1, 64>}, {pipeline_mode = #tpu.pipeline_mode<synchronous>, transform_indices = @transform_3, window_bounds = array<i64: 512, 10>}, {pipeline_mode = #tpu.pipeline_mode<synchronous>, transform_indices = @transform_4, window_bounds = array<i64: 1, 10>}, {transform_indices = @transform_5, window_bounds = array<i64: 1, 1, 10>}]} {
    %c0 = arith.constant 0 : index
    %c0_0 = arith.constant 0 : index
    %c0_1 = arith.constant 0 : index
    %c0_2 = arith.constant 0 : index
    %0 = vector.load %arg1[%c0, %c0_0, %c0_1, %c0_2] : memref<1x2x9x72xf32, #tpu.memory_space<vmem>>, vector<1x2x9x72xf32>
    %1 = vector.extract_strided_slice %0 {offsets = [0, 0, 0, 0], sizes = [1, 1, 9, 72], strides = [1, 1, 1, 1]} : vector<1x2x9x72xf32> to vector<1x1x9x72xf32>
    %2 = vector.shape_cast %1 : vector<1x1x9x72xf32> to vector<9x72xf32>
    %3 = vector.extract_strided_slice %0 {offsets = [0, 1, 0, 0], sizes = [1, 1, 9, 72], strides = [1, 1, 1, 1]} : vector<1x2x9x72xf32> to vector<1x1x9x72xf32>
    %4 = vector.shape_cast %3 : vector<1x1x9x72xf32> to vector<9x72xf32>
    %c0_3 = arith.constant 0 : index
    %c0_4 = arith.constant 0 : index
    %c0_5 = arith.constant 0 : index
    %5 = vector.load %arg2[%c0_3, %c0_4, %c0_5] : memref<3x72x128xf32, #tpu.memory_space<vmem>>, vector<1x72x128xf32>
    %6 = vector.shape_cast %5 : vector<1x72x128xf32> to vector<72x128xf32>
    %c1 = arith.constant 1 : index
    %c0_6 = arith.constant 0 : index
    %c0_7 = arith.constant 0 : index
    %7 = vector.load %arg2[%c1, %c0_6, %c0_7] : memref<3x72x128xf32, #tpu.memory_space<vmem>>, vector<1x72x128xf32>
    %8 = vector.shape_cast %7 : vector<1x72x128xf32> to vector<72x128xf32>
    %c2 = arith.constant 2 : index
    %c0_8 = arith.constant 0 : index
    %c0_9 = arith.constant 0 : index
    %9 = vector.load %arg2[%c2, %c0_8, %c0_9] : memref<3x72x128xf32, #tpu.memory_space<vmem>>, vector<1x72x128xf32>
    %10 = vector.shape_cast %9 : vector<1x72x128xf32> to vector<72x128xf32>
    %11 = vector.extract_strided_slice %2 {offsets = [0, 0], sizes = [8, 72], strides = [1, 1]} : vector<9x72xf32> to vector<8x72xf32>
    %cst = arith.constant dense<0.000000e+00> : vector<8x128xf32>
    %12 = tpu.matmul %11, %6, %cst {dimension_numbers = #tpu.dot_dimension_numbers<[1], [0], [0], [1], [0, 0, 1, 1], [], []>} : vector<8x72xf32>, vector<72x128xf32>, vector<8x128xf32> -> vector<8x128xf32>
    %13 = vector.extract_strided_slice %4 {offsets = [0, 0], sizes = [8, 72], strides = [1, 1]} : vector<9x72xf32> to vector<8x72xf32>
    %cst_10 = arith.constant dense<0.000000e+00> : vector<8x128xf32>
    %14 = tpu.matmul %13, %8, %cst_10 {dimension_numbers = #tpu.dot_dimension_numbers<[1], [0], [0], [1], [0, 0, 1, 1], [], []>} : vector<8x72xf32>, vector<72x128xf32>, vector<8x128xf32> -> vector<8x128xf32>
    %15 = arith.addf %12, %14 : vector<8x128xf32>
    %16 = vector.extract_strided_slice %2 {offsets = [1, 0], sizes = [8, 72], strides = [1, 1]} : vector<9x72xf32> to vector<8x72xf32>
    %cst_11 = arith.constant dense<0.000000e+00> : vector<8x128xf32>
    %17 = tpu.matmul %16, %10, %cst_11 {dimension_numbers = #tpu.dot_dimension_numbers<[1], [0], [0], [1], [0, 0, 1, 1], [], []>} : vector<8x72xf32>, vector<72x128xf32>, vector<8x128xf32> -> vector<8x128xf32>
    %18 = arith.addf %15, %17 : vector<8x128xf32>
    %19 = vector.extract_strided_slice %4 {offsets = [0, 0], sizes = [8, 72], strides = [1, 1]} : vector<9x72xf32> to vector<8x72xf32>
    %cst_12 = arith.constant dense<0.000000e+00> : vector<8x128xf32>
    %20 = tpu.matmul %19, %6, %cst_12 {dimension_numbers = #tpu.dot_dimension_numbers<[1], [0], [0], [1], [0, 0, 1, 1], [], []>} : vector<8x72xf32>, vector<72x128xf32>, vector<8x128xf32> -> vector<8x128xf32>
    %21 = vector.extract_strided_slice %2 {offsets = [1, 0], sizes = [8, 72], strides = [1, 1]} : vector<9x72xf32> to vector<8x72xf32>
    %cst_13 = arith.constant dense<0.000000e+00> : vector<8x128xf32>
    %22 = tpu.matmul %21, %8, %cst_13 {dimension_numbers = #tpu.dot_dimension_numbers<[1], [0], [0], [1], [0, 0, 1, 1], [], []>} : vector<8x72xf32>, vector<72x128xf32>, vector<8x128xf32> -> vector<8x128xf32>
    %23 = arith.addf %20, %22 : vector<8x128xf32>
    %24 = vector.extract_strided_slice %4 {offsets = [1, 0], sizes = [8, 72], strides = [1, 1]} : vector<9x72xf32> to vector<8x72xf32>
    %cst_14 = arith.constant dense<0.000000e+00> : vector<8x128xf32>
    %25 = tpu.matmul %24, %10, %cst_14 {dimension_numbers = #tpu.dot_dimension_numbers<[1], [0], [0], [1], [0, 0, 1, 1], [], []>} : vector<8x72xf32>, vector<72x128xf32>, vector<8x128xf32> -> vector<8x128xf32>
    %26 = arith.addf %23, %25 : vector<8x128xf32>
    %27 = arith.maximumf %18, %26 : vector<8x128xf32>
    %28 = vector.extract_strided_slice %27 {offsets = [0, 0], sizes = [8, 64], strides = [1, 1]} : vector<8x128xf32> to vector<8x64xf32>
    %29 = vector.extract_strided_slice %27 {offsets = [0, 64], sizes = [8, 64], strides = [1, 1]} : vector<8x128xf32> to vector<8x64xf32>
    %30 = arith.maximumf %28, %29 : vector<8x64xf32>
    %c0_15 = arith.constant 0 : index
    %c0_16 = arith.constant 0 : index
    %31 = vector.load %arg3[%c0_15, %c0_16] : memref<1x64xf32, #tpu.memory_space<vmem>>, vector<1x64xf32>
    %32 = vector.broadcast %31 : vector<1x64xf32> to vector<8x64xf32>
    %33 = arith.addf %30, %32 : vector<8x64xf32>
    %cst_17 = arith.constant 0.000000e+00 : f32
    %34 = vector.broadcast %cst_17 : f32 to vector<8x64xf32>
    %35 = arith.maximumf %33, %34 : vector<8x64xf32>
    %c0_18 = arith.constant 0 : index
    %c0_19 = arith.constant 0 : index
    %36 = vector.load %arg5[%c0_18, %c0_19] : memref<1x10xf32, #tpu.memory_space<vmem>>, vector<1x10xf32>
    %37 = vector.extract_strided_slice %35 {offsets = [0, 0], sizes = [1, 64], strides = [1, 1]} : vector<8x64xf32> to vector<1x64xf32>
    %c0_20 = arith.constant 0 : index
    %c0_21 = arith.constant 0 : index
    %38 = vector.load %arg4[%c0_20, %c0_21] : memref<512x10xf32, #tpu.memory_space<vmem>>, vector<64x10xf32>
    %cst_22 = arith.constant dense<0.000000e+00> : vector<1x10xf32>
    %39 = tpu.matmul %37, %38, %cst_22 {dimension_numbers = #tpu.dot_dimension_numbers<[1], [0], [0], [1], [0, 0, 1, 1], [], []>} : vector<1x64xf32>, vector<64x10xf32>, vector<1x10xf32> -> vector<1x10xf32>
    %40 = arith.addf %36, %39 : vector<1x10xf32>
    %41 = vector.extract_strided_slice %35 {offsets = [1, 0], sizes = [1, 64], strides = [1, 1]} : vector<8x64xf32> to vector<1x64xf32>
    %c64 = arith.constant 64 : index
    %c0_23 = arith.constant 0 : index
    %42 = vector.load %arg4[%c64, %c0_23] : memref<512x10xf32, #tpu.memory_space<vmem>>, vector<64x10xf32>
    %cst_24 = arith.constant dense<0.000000e+00> : vector<1x10xf32>
    %43 = tpu.matmul %41, %42, %cst_24 {dimension_numbers = #tpu.dot_dimension_numbers<[1], [0], [0], [1], [0, 0, 1, 1], [], []>} : vector<1x64xf32>, vector<64x10xf32>, vector<1x10xf32> -> vector<1x10xf32>
    %44 = arith.addf %40, %43 : vector<1x10xf32>
    %45 = vector.extract_strided_slice %35 {offsets = [2, 0], sizes = [1, 64], strides = [1, 1]} : vector<8x64xf32> to vector<1x64xf32>
    %c128 = arith.constant 128 : index
    %c0_25 = arith.constant 0 : index
    %46 = vector.load %arg4[%c128, %c0_25] : memref<512x10xf32, #tpu.memory_space<vmem>>, vector<64x10xf32>
    %cst_26 = arith.constant dense<0.000000e+00> : vector<1x10xf32>
    %47 = tpu.matmul %45, %46, %cst_26 {dimension_numbers = #tpu.dot_dimension_numbers<[1], [0], [0], [1], [0, 0, 1, 1], [], []>} : vector<1x64xf32>, vector<64x10xf32>, vector<1x10xf32> -> vector<1x10xf32>
    %48 = arith.addf %44, %47 : vector<1x10xf32>
    %49 = vector.extract_strided_slice %35 {offsets = [3, 0], sizes = [1, 64], strides = [1, 1]} : vector<8x64xf32> to vector<1x64xf32>
    %c192 = arith.constant 192 : index
    %c0_27 = arith.constant 0 : index
    %50 = vector.load %arg4[%c192, %c0_27] : memref<512x10xf32, #tpu.memory_space<vmem>>, vector<64x10xf32>
    %cst_28 = arith.constant dense<0.000000e+00> : vector<1x10xf32>
    %51 = tpu.matmul %49, %50, %cst_28 {dimension_numbers = #tpu.dot_dimension_numbers<[1], [0], [0], [1], [0, 0, 1, 1], [], []>} : vector<1x64xf32>, vector<64x10xf32>, vector<1x10xf32> -> vector<1x10xf32>
    %52 = arith.addf %48, %51 : vector<1x10xf32>
    %53 = vector.extract_strided_slice %35 {offsets = [4, 0], sizes = [1, 64], strides = [1, 1]} : vector<8x64xf32> to vector<1x64xf32>
    %c256 = arith.constant 256 : index
    %c0_29 = arith.constant 0 : index
    %54 = vector.load %arg4[%c256, %c0_29] : memref<512x10xf32, #tpu.memory_space<vmem>>, vector<64x10xf32>
    %cst_30 = arith.constant dense<0.000000e+00> : vector<1x10xf32>
    %55 = tpu.matmul %53, %54, %cst_30 {dimension_numbers = #tpu.dot_dimension_numbers<[1], [0], [0], [1], [0, 0, 1, 1], [], []>} : vector<1x64xf32>, vector<64x10xf32>, vector<1x10xf32> -> vector<1x10xf32>
    %56 = arith.addf %52, %55 : vector<1x10xf32>
    %57 = vector.extract_strided_slice %35 {offsets = [5, 0], sizes = [1, 64], strides = [1, 1]} : vector<8x64xf32> to vector<1x64xf32>
    %c320 = arith.constant 320 : index
    %c0_31 = arith.constant 0 : index
    %58 = vector.load %arg4[%c320, %c0_31] : memref<512x10xf32, #tpu.memory_space<vmem>>, vector<64x10xf32>
    %cst_32 = arith.constant dense<0.000000e+00> : vector<1x10xf32>
    %59 = tpu.matmul %57, %58, %cst_32 {dimension_numbers = #tpu.dot_dimension_numbers<[1], [0], [0], [1], [0, 0, 1, 1], [], []>} : vector<1x64xf32>, vector<64x10xf32>, vector<1x10xf32> -> vector<1x10xf32>
    %60 = arith.addf %56, %59 : vector<1x10xf32>
    %61 = vector.extract_strided_slice %35 {offsets = [6, 0], sizes = [1, 64], strides = [1, 1]} : vector<8x64xf32> to vector<1x64xf32>
    %c384 = arith.constant 384 : index
    %c0_33 = arith.constant 0 : index
    %62 = vector.load %arg4[%c384, %c0_33] : memref<512x10xf32, #tpu.memory_space<vmem>>, vector<64x10xf32>
    %cst_34 = arith.constant dense<0.000000e+00> : vector<1x10xf32>
    %63 = tpu.matmul %61, %62, %cst_34 {dimension_numbers = #tpu.dot_dimension_numbers<[1], [0], [0], [1], [0, 0, 1, 1], [], []>} : vector<1x64xf32>, vector<64x10xf32>, vector<1x10xf32> -> vector<1x10xf32>
    %64 = arith.addf %60, %63 : vector<1x10xf32>
    %65 = vector.extract_strided_slice %35 {offsets = [7, 0], sizes = [1, 64], strides = [1, 1]} : vector<8x64xf32> to vector<1x64xf32>
    %c448 = arith.constant 448 : index
    %c0_35 = arith.constant 0 : index
    %66 = vector.load %arg4[%c448, %c0_35] : memref<512x10xf32, #tpu.memory_space<vmem>>, vector<64x10xf32>
    %cst_36 = arith.constant dense<0.000000e+00> : vector<1x10xf32>
    %67 = tpu.matmul %65, %66, %cst_36 {dimension_numbers = #tpu.dot_dimension_numbers<[1], [0], [0], [1], [0, 0, 1, 1], [], []>} : vector<1x64xf32>, vector<64x10xf32>, vector<1x10xf32> -> vector<1x10xf32>
    %68 = arith.addf %64, %67 : vector<1x10xf32>
    %c0_37 = arith.constant 0 : index
    %c0_38 = arith.constant 0 : index
    %c0_39 = arith.constant 0 : index
    %69 = vector.load %arg6[%c0_37, %c0_38, %c0_39] : memref<1x1x10xf32, #tpu.memory_space<vmem>>, vector<1x1x10xf32>
    %70 = vector.shape_cast %69 : vector<1x1x10xf32> to vector<1x10xf32>
    %71 = vector.shape_cast %68 : vector<1x10xf32> to vector<1x1x10xf32>
    tpu.vector_store %arg6[%c0_37, %c0_38, %c0_39], %71 {strides = array<i32>} : memref<1x1x10xf32, #tpu.memory_space<vmem>>, vector<1x1x10xf32>,
    return
  }
  func.func @transform_0(%arg0: i32) -> (i32, i32, i32, i32) {
    %c0_i32 = arith.constant 0 : i32
    %c0_i32_0 = arith.constant 0 : i32
    %c0_i32_1 = arith.constant 0 : i32
    %c0_i32_2 = arith.constant 0 : i32
    return %arg0, %c0_i32, %c0_i32_0, %c0_i32_1 : i32, i32, i32, i32
  }
  func.func @transform_1(%arg0: i32) -> (i32, i32, i32) {
    %c0_i32 = arith.constant 0 : i32
    %c0_i32_0 = arith.constant 0 : i32
    %c0_i32_1 = arith.constant 0 : i32
    %c0_i32_2 = arith.constant 0 : i32
    return %c0_i32, %c0_i32_0, %c0_i32_1 : i32, i32, i32
  }
  func.func @transform_2(%arg0: i32) -> (i32, i32) {
    %c0_i32 = arith.constant 0 : i32
    %c0_i32_0 = arith.constant 0 : i32
    %c0_i32_1 = arith.constant 0 : i32
    return %c0_i32, %c0_i32_0 : i32, i32
  }
  func.func @transform_3(%arg0: i32) -> (i32, i32) {
    %c0_i32 = arith.constant 0 : i32
    %c0_i32_0 = arith.constant 0 : i32
    %c0_i32_1 = arith.constant 0 : i32
    return %c0_i32, %c0_i32_0 : i32, i32
  }
  func.func @transform_4(%arg0: i32) -> (i32, i32) {
    %c0_i32 = arith.constant 0 : i32
    %c0_i32_0 = arith.constant 0 : i32
    %c0_i32_1 = arith.constant 0 : i32
    return %c0_i32, %c0_i32_0 : i32, i32
  }
  func.func @transform_5(%arg0: i32) -> (i32, i32, i32) {
    %c0_i32 = arith.constant 0 : i32
    %c0_i32_0 = arith.constant 0 : i32
    %c0_i32_1 = arith.constant 0 : i32
    return %arg0, %c0_i32, %c0_i32_0 : i32, i32, i32
  }
}

</mosaic_0001>

<llo_original>
// kernel: tile.8
$region0: #{tile.8}
  #allocation0 [shape = 's32[1]{0}', space=sflag, size = 0x4, scoped, tag = 'scoped memory for tile.8']
  %s0 = inlined_call_operand.vmem [shape: f32[8], index: 0, kind: input, shape index: {}]
  %s1 = inlined_call_operand.vmem [shape: f32[8,8], index: 1, kind: output, shape index: {}]
  // Predicated region
  $region2: #{tile.8} parent=0 // pred_check
    _
  $region3: #{tile.8} parent=0 // pred_check_branch
    %3 = sbr.rel (0) target = $region5
  $region4: #{tile.8} parent=0 // pred_region
    _
  $region5: #{tile.8} parent=0 // pred_fallthru
    _
  %v4 = vld [vmem:[%s0] ss:$0 sm:$0xff]
  %5 = vst [vmem:[%s1] sm:$0xff] %v4

// kernel: tile.9
$region0: #{tile.9}
  %s0 = inlined_call_operand.vmem [shape: f32[8,8], index: 0, kind: input, shape index: {}]
  %s1 = inlined_call_operand.vmem [shape: f32[1,64], index: 1, kind: output, shape index: {}]
  $region1: #{tile.9} parent=0
    #allocation0 [shape = 'u8[4096]{0}', space=vmem, size = 0x1000, scoped, tag = 'scoped mem for output reshape']
    %v2 = vld [vmem:[%s0] sm:$0x1]
    %vm3 = vcmask 64512
    %4 = vst.msk [vmem:[#allocation0] sm:$0x1] %vm3, %v2
    %s5 = scalar_lea.vmem %s0, 7
    %v6 = vld [vmem:[%s5] sm:$0x1]
    %7 = vrot.lane.b32.xlu0 %v6, 56
    %v8 = vpop.permute.xlu0 %7
    %vm9 = vcmask 523712
    %10 = vst.msk [vmem:[#allocation0] sm:$0x1] %vm9, %v8
    %s11 = scalar_lea.vmem %s0, 6
    %v12 = vld [vmem:[%s11] sm:$0x1]
    %13 = vrot.lane.b32.xlu0 %v12, 48
    %v14 = vpop.permute.xlu0 %13
    %vm15 = vcmask 458112
    %16 = vst.msk [vmem:[#allocation0] sm:$0x1] %vm15, %v14
    %s17 = scalar_lea.vmem %s0, 5
    %v18 = vld [vmem:[%s17] sm:$0x1]
    %19 = vrot.lane.b32.xlu0 %v18, 40
    %v20 = vpop.permute.xlu0 %19
    %vm21 = vcmask 392512
    %22 = vst.msk [vmem:[#allocation0] sm:$0x1] %vm21, %v20
    %s23 = scalar_lea.vmem %s0, 4
    %v24 = vld [vmem:[%s23] sm:$0x1]
    %25 = vrot.lane.b32.xlu0 %v24, 32
    %v26 = vpop.permute.xlu0 %25
    %vm27 = vcmask 326912
    %28 = vst.msk [vmem:[#allocation0] sm:$0x1] %vm27, %v26
    %s29 = scalar_lea.vmem %s0, 3
    %v30 = vld [vmem:[%s29] sm:$0x1]
    %31 = vrot.lane.b32.xlu0 %v30, 24
    %v32 = vpop.permute.xlu0 %31
    %vm33 = vcmask 261312
    %34 = vst.msk [vmem:[#allocation0] sm:$0x1] %vm33, %v32
    %s35 = scalar_lea.vmem %s0, 2
    %v36 = vld [vmem:[%s35] sm:$0x1]
    %37 = vrot.lane.b32.xlu0 %v36, 16
    %v38 = vpop.permute.xlu0 %37
    %vm39 = vcmask 195712
    %40 = vst.msk [vmem:[#allocation0] sm:$0x1] %vm39, %v38
    %s41 = scalar_lea.vmem %s0, 1
    %v42 = vld [vmem:[%s41] sm:$0x1]
    %43 = vrot.lane.b32.xlu0 %v42, 8
    %v44 = vpop.permute.xlu0 %43
    %vm45 = vcmask 130112
    %46 = vst.msk [vmem:[#allocation0] sm:$0x1] %vm45, %v44
    %s48 = ssub.s32 2, 1
    %v49 = vld [vmem:[#allocation0] sm:%s48]
    %s51 = ssub.s32 2, 1
    %52 = vst [vmem:[%s1] sm:%s51] %v49

// kernel: flat_model_forward.1
$region0: #{flat_model_forward.1}
  #allocation0 [shape = 'u32[]', space=smem, size = 0x4, offset = 0x4, fixed_abs, tag = 'smem constant byte address 0x4 - core index']
  #allocation1 [shape = 'u32[72,128]{1,0:T(1,128)}', space=vmem, size = 0x9000, scoped, tag = 'internal scratch']
  %s0 = inlined_call_operand.vmem [shape: f32[2,2,9,72], index: 0, kind: input, shape index: {}]
  %s1 = inlined_call_operand.vmem [shape: f32[3,72,128], index: 1, kind: input, shape index: {}]
  %s2 = inlined_call_operand.vmem [shape: f32[1,64], index: 2, kind: input, shape index: {}]
  %s3 = inlined_call_operand.vmem [shape: f32[512,10], index: 3, kind: input, shape index: {}]
  %s4 = inlined_call_operand.vmem [shape: f32[1,10], index: 4, kind: input, shape index: {}]
  %s5 = inlined_call_operand.hbm [shape: f32[2,1,10], index: 5, kind: output, shape index: {}]
  %s6 = sld [smem:[#allocation0]]
  $region53: #{flat_model_forward.1} parent=0
    _
  %s8 = ssub.s32 1, %s6
  %s9 = scalar_select 0, %s8, %s6
  $region1: #{flat_model_forward.1} parent=0
    #allocation2 [shape = 'u8[1024]{0}', space=vmem, size = 0x400, scoped, tag = 'output window, operand 0']
    #allocation3 [shape = 's32[2]{0}', space=sflag, size = 0x8, scoped, tag = 'scoped memory for flat_model_forward.1']
    %10 = vsyncpa [#allocation3], 0
    %s11 = scalar_lea.sflag [#allocation3], 1
    %12 = vsyncpa %s11, 0
    loop: start=0, step=1, limit=4
    $region2: #{flat_model_forward.1} parent=1 // loop_pre_header
      _
    $region3: #{flat_model_forward.1} parent=1 // loop_header
      %s14 = sphi 0, %s18
      %p15 = scmp.ge.s32.totalorder %s14, 4
      %s24 = sphi 0, %s26
      %s27 = sphi 0, %s24
      %s28 = sphi 0, %s27
      %s44 = sphi 0, %s28
      %s48 = sphi 0, %s48
      %s50 = sphi 0, %s48
      %s51 = sphi 0, %s50
      %s65 = sphi 0, %s51
      %s69 = sphi 0, %s69
      %s71 = sphi 0, %s69
      %s72 = sphi 0, %s71
      %s86 = sphi 0, %s72
      %s90 = sphi 0, %s90
      %s92 = sphi 0, %s90
      %s93 = sphi 0, %s92
      %s107 = sphi 0, %s93
      %s111 = sphi 0, %s111
      %s113 = sphi 0, %s111
      %s114 = sphi 0, %s113
      %s128 = sphi 0, %s114
      %s134 = sphi 0, %s136
      %s137 = sphi 0, %s134
      %s138 = sphi 0, %s137
      %s154 = sphi 0, %s138
    $region4: #{flat_model_forward.1} parent=1 // loop_header_branch
      %17 = sbr.rel (%p15) target = $region8
    $region5: #{flat_model_forward.1} parent=1 // loop_body
      %s19 = ssub.s32 %s14, 1
      %s20 = ssub.s32 %s14, 2
      %s21 = sadd.s32 %s14, 1
      %s22 = ssub.s32 %s14, %s21
      %p23 = scmp.eq.s32.totalorder %s22, 0
      %s25 = sadd.s32 %s24, 1
      %s26 = scalar_select %p23, %s24, %s25
      %p29 = pneg %p23
      %p30 = scmp.eq.s32.totalorder %s14, 1
      %p31 = por %p29, %p30
      %p32 = scmp.ne.s32.totalorder %s24, %s27
      %p33 = scmp.eq.s32.totalorder %s14, 0
      %p34 = por %p32, %p33
      %p35 = scmp.ne.s32.totalorder %s24, %s27
      %p36 = scmp.eq.s32.totalorder %s19, 1
      %p37 = por %p35, %p36
      %p38 = scmp.ne.s32.totalorder %s27, %s28
      %p39 = scmp.eq.s32.totalorder %s19, 0
      %p40 = por %p38, %p39
      %p41 = scmp.ne.s32.totalorder %s27, %s28
      %p42 = scmp.eq.s32.totalorder %s20, 1
      %p43 = por %p41, %p42
      %p45 = scmp.ne.s32.totalorder %s28, %s44
      %p46 = scmp.eq.s32.totalorder %s20, 0
      %p47 = por %p45, %p46
      %s49 = sadd.s32 %s48, 1
      %p52 = scmp.eq.s32.totalorder %s14, 1
      %p53 = scmp.ne.s32.totalorder %s48, %s50
      %p54 = scmp.eq.s32.totalorder %s14, 0
      %p55 = por %p53, %p54
      %p56 = scmp.ne.s32.totalorder %s48, %s50
      %p57 = scmp.eq.s32.totalorder %s19, 1
      %p58 = por %p56, %p57
      %p59 = scmp.ne.s32.totalorder %s50, %s51
      %p60 = scmp.eq.s32.totalorder %s19, 0
      %p61 = por %p59, %p60
      %p62 = scmp.ne.s32.totalorder %s50, %s51
      %p63 = scmp.eq.s32.totalorder %s20, 1
      %p64 = por %p62, %p63
      %p66 = scmp.ne.s32.totalorder %s51, %s65
      %p67 = scmp.eq.s32.totalorder %s20, 0
      %p68 = por %p66, %p67
      %s70 = sadd.s32 %s69, 1
      %p73 = scmp.eq.s32.totalorder %s14, 1
      %p74 = scmp.ne.s32.totalorder %s69, %s71
      %p75 = scmp.eq.s32.totalorder %s14, 0
      %p76 = por %p74, %p75
      %p77 = scmp.ne.s32.totalorder %s69, %s71
      %p78 = scmp.eq.s32.totalorder %s19, 1
      %p79 = por %p77, %p78
      %p80 = scmp.ne.s32.totalorder %s71, %s72
      %p81 = scmp.eq.s32.totalorder %s19, 0
      %p82 = por %p80, %p81
      %p83 = scmp.ne.s32.totalorder %s71, %s72
      %p84 = scmp.eq.s32.totalorder %s20, 1
      %p85 = por %p83, %p84
      %p87 = scmp.ne.s32.totalorder %s72, %s86
      %p88 = scmp.eq.s32.totalorder %s20, 0
      %p89 = por %p87, %p88
      %s91 = sadd.s32 %s90, 1
      %p94 = scmp.eq.s32.totalorder %s14, 1
      %p95 = scmp.ne.s32.totalorder %s90, %s92
      %p96 = scmp.eq.s32.totalorder %s14, 0
      %p97 = por %p95, %p96
      %p98 = scmp.ne.s32.totalorder %s90, %s92
      %p99 = scmp.eq.s32.totalorder %s19, 1
      %p100 = por %p98, %p99
      %p101 = scmp.ne.s32.totalorder %s92, %s93
      %p102 = scmp.eq.s32.totalorder %s19, 0
      %p103 = por %p101, %p102
      %p104 = scmp.ne.s32.totalorder %s92, %s93
      %p105 = scmp.eq.s32.totalorder %s20, 1
      %p106 = por %p104, %p105
      %p108 = scmp.ne.s32.totalorder %s93, %s107
      %p109 = scmp.eq.s32.totalorder %s20, 0
      %p110 = por %p108, %p109
      %s112 = sadd.s32 %s111, 1
      %p115 = scmp.eq.s32.totalorder %s14, 1
      %p116 = scmp.ne.s32.totalorder %s111, %s113
      %p117 = scmp.eq.s32.totalorder %s14, 0
      %p118 = por %p116, %p117
      %p119 = scmp.ne.s32.totalorder %s111, %s113
      %p120 = scmp.eq.s32.totalorder %s19, 1
      %p121 = por %p119, %p120
      %p122 = scmp.ne.s32.totalorder %s113, %s114
      %p123 = scmp.eq.s32.totalorder %s19, 0
      %p124 = por %p122, %p123
      %p125 = scmp.ne.s32.totalorder %s113, %s114
      %p126 = scmp.eq.s32.totalorder %s20, 1
      %p127 = por %p125, %p126
      %p129 = scmp.ne.s32.totalorder %s114, %s128
      %p130 = scmp.eq.s32.totalorder %s20, 0
      %p131 = por %p129, %p130
      %s132 = ssub.s32 %s14, %s21
      %p133 = scmp.eq.s32.totalorder %s132, 0
      %s135 = sadd.s32 %s134, 1
      %s136 = scalar_select %p133, %s134, %s135
      %p139 = pneg %p133
      %p140 = scmp.eq.s32.totalorder %s14, 1
      %p141 = por %p139, %p140
      %p142 = scmp.ne.s32.totalorder %s134, %s137
      %p143 = scmp.eq.s32.totalorder %s14, 0
      %p144 = por %p142, %p143
      %p145 = scmp.ne.s32.totalorder %s134, %s137
      %p146 = scmp.eq.s32.totalorder %s19, 1
      %p147 = por %p145, %p146
      %p148 = scmp.ne.s32.totalorder %s137, %s138
      %p149 = scmp.eq.s32.totalorder %s19, 0
      %p150 = por %p148, %p149
      %p151 = scmp.ne.s32.totalorder %s137, %s138
      %p152 = scmp.eq.s32.totalorder %s20, 1
      %p153 = por %p151, %p152
      %p155 = scmp.ne.s32.totalorder %s138, %s154
      %p156 = scmp.eq.s32.totalorder %s20, 0
      %p157 = por %p155, %p156
      %p158 = scmp.le.s32.totalorder 1, %s14
      %p159 = scmp.lt.s32.totalorder %s14, 3
      %p160 = pnand %p158, %p159
      %p161 = pneg %p160
      // Predicated region
      $region9: #{flat_model_forward.1} parent=5 // pred_check
        _
      $region10: #{flat_model_forward.1} parent=5 // pred_check_branch
        %163 = sbr.rel (%p160) target = $region12
      $region11: #{flat_model_forward.1} parent=5 // pred_region
        %s164 = ssub.s32 %s14, 1
        // Predicated region
        $region13: #{flat_model_forward.1} parent=11 // pred_check
          %p165 = pneg %p61
        $region14: #{flat_model_forward.1} parent=11 // pred_check_branch
          %167 = sbr.rel (%p165) target = $region16
        $region15: #{flat_model_forward.1} parent=11 // pred_region
          _
        $region16: #{flat_model_forward.1} parent=11 // pred_fallthru
          _
        // Predicated region
        $region17: #{flat_model_forward.1} parent=11 // pred_check
          %p168 = pneg %p82
        $region18: #{flat_model_forward.1} parent=11 // pred_check_branch
          %170 = sbr.rel (%p168) target = $region20
        $region19: #{flat_model_forward.1} parent=11 // pred_region
          _
        $region20: #{flat_model_forward.1} parent=11 // pred_fallthru
          _
        // Predicated region
        $region21: #{flat_model_forward.1} parent=11 // pred_check
          %p171 = pneg %p103
        $region22: #{flat_model_forward.1} parent=11 // pred_check_branch
          %173 = sbr.rel (%p171) target = $region24
        $region23: #{flat_model_forward.1} parent=11 // pred_region
          _
        $region24: #{flat_model_forward.1} parent=11 // pred_fallthru
          _
        // Predicated region
        $region25: #{flat_model_forward.1} parent=11 // pred_check
          %p174 = pneg %p124
        $region26: #{flat_model_forward.1} parent=11 // pred_check_branch
          %176 = sbr.rel (%p174) target = $region28
        $region27: #{flat_model_forward.1} parent=11 // pred_region
          _
        $region28: #{flat_model_forward.1} parent=11 // pred_fallthru
          _
      $region12: #{flat_model_forward.1} parent=5 // pred_fallthru
        _
      %p177 = scmp.lt.s32.totalorder %s14, 2
      // Predicated region
      $region29: #{flat_model_forward.1} parent=5 // pred_check
        %p178 = pneg %p177
      $region30: #{flat_model_forward.1} parent=5 // pred_check_branch
        %180 = sbr.rel (%p178) target = $region32
      $region31: #{flat_model_forward.1} parent=5 // pred_region
        // Predicated region
        $region33: #{flat_model_forward.1} parent=31 // pred_check
          %p181 = pneg %p34
        $region34: #{flat_model_forward.1} parent=31 // pred_check_branch
          %183 = sbr.rel (%p181) target = $region36
        $region35: #{flat_model_forward.1} parent=31 // pred_region
          %p184 = scmp.lt.s32.totalorder %s14, 1
          %s185 = scalar_select %p184, %s14, 1
          %s186 = smul.addr %s185, 4
          %s187 = smul.addr %s186, 8
          %s188 = scalar_lea.vmem %s0, %s187
        $region36: #{flat_model_forward.1} parent=31 // pred_fallthru
          _
      $region32: #{flat_model_forward.1} parent=5 // pred_fallthru
        _
      %p189 = scmp.le.s32.totalorder 1, %s14
      %p190 = scmp.lt.s32.totalorder %s14, 3
      %p191 = pnand %p189, %p190
      %p192 = pneg %p191
      // Predicated region
      $region37: #{flat_model_forward.1} parent=5 // pred_check
        _
      $region38: #{flat_model_forward.1} parent=5 // pred_check_branch
        %194 = sbr.rel (%p191) target = $region40
      $region39: #{flat_model_forward.1} parent=5 // pred_region
        %s195 = ssub.s32 %s14, 1
        %p196 = scmp.lt.s32.totalorder %s19, 1
        %s197 = scalar_select %p196, %s19, 1
        %s198 = smul.addr %s197, 4
        %s199 = smul.addr %s198, 8
        %s200 = scalar_lea.vmem %s0, %s199
        %p201 = pneg %p40
        %p202 = pneg %p37
        %p203 = pneg %p61
        %p204 = pneg %p58
        %p205 = pneg %p82
        %p206 = pneg %p79
        %p207 = pneg %p103
        %p208 = pneg %p100
        %p209 = pneg %p124
        %p210 = pneg %p121
        %p211 = pneg %p150
        %p212 = pneg %p147
        %s213 = sand.u32 %s137, 1
        %s214 = scalar_lea.sflag [#allocation3], %s213
        %s215 = sand.u32 %s137, 1
        %s216 = scalar_lea.vmem [#allocation2], %s215
        %p217 = scmp.lt.s32.totalorder %s19, 1
        %s218 = scalar_select %p217, %s19, 1
        %s219 = smul.addr %s218, 4
        %s220 = smul.addr %s219, 8
        %s221 = scalar_lea.vmem %s0, %s220
        %v222 = vld [vmem:[%s221] sm:$0xff]
        %v223 = vld [vmem:[%s221 + $0x8] sm:$0x1]
        %v224 = vld [vmem:[%s221 + $0x10] sm:$0xff]
        %v225 = vld [vmem:[%s221 + $0x18] sm:$0x1]
        %v226 = vld [vmem:[%s1] sm:$0xff]
        %v227 = vld [vmem:[%s1 + $0x8] sm:$0xff]
        %v228 = vld [vmem:[%s1 + $0x10] sm:$0xff]
        %v229 = vld [vmem:[%s1 + $0x18] sm:$0xff]
        %v230 = vld [vmem:[%s1 + $0x20] sm:$0xff]
        %v231 = vld [vmem:[%s1 + $0x28] sm:$0xff]
        %v232 = vld [vmem:[%s1 + $0x30] sm:$0xff]
        %v233 = vld [vmem:[%s1 + $0x38] sm:$0xff]
        %v234 = vld [vmem:[%s1 + $0x40] sm:$0xff]
        %s235 = scalar_lea.vmem %s1, 72
        %v236 = vld [vmem:[%s235] sm:$0xff]
        %v237 = vld [vmem:[%s235 + $0x8] sm:$0xff]
        %v238 = vld [vmem:[%s235 + $0x10] sm:$0xff]
        %v239 = vld [vmem:[%s235 + $0x18] sm:$0xff]
        %v240 = vld [vmem:[%s235 + $0x20] sm:$0xff]
        %v241 = vld [vmem:[%s235 + $0x28] sm:$0xff]
        %v242 = vld [vmem:[%s235 + $0x30] sm:$0xff]
        %v243 = vld [vmem:[%s235 + $0x38] sm:$0xff]
        %v244 = vld [vmem:[%s235 + $0x40] sm:$0xff]
        %s245 = scalar_lea.vmem %s1, 144
        %v246 = vld [vmem:[%s245] sm:$0xff]
        %v247 = vld [vmem:[%s245 + $0x8] sm:$0xff]
        %v248 = vld [vmem:[%s245 + $0x10] sm:$0xff]
        %v249 = vld [vmem:[%s245 + $0x18] sm:$0xff]
        %v250 = vld [vmem:[%s245 + $0x20] sm:$0xff]
        %v251 = vld [vmem:[%s245 + $0x28] sm:$0xff]
        %v252 = vld [vmem:[%s245 + $0x30] sm:$0xff]
        %v253 = vld [vmem:[%s245 + $0x38] sm:$0xff]
        %v254 = vld [vmem:[%s245 + $0x40] sm:$0xff]
        %vm255 = vcmask 588800
        %v257 = vsel %vm255, %v224, 0
        %259 = vmatpush.msra.mxu0 0.0
        %260 = vmatpush.msra.mxu0 0.0
        %261 = vmatpush.msra.mxu0 0.0
        %262 = vmatpush.msra.mxu0 0.0
        %263 = vmatpush.msra.mxu0 0.0
        %264 = vmatpush.msra.mxu0 0.0
        %265 = vmatpush.msra.mxu0 0.0
        %266 = vmatpush.msra.mxu0 %v244
        %267 = vmatpush.msra.mxu0 %v243
        %268 = vmatpush.msra.mxu0 %v242
        %269 = vmatpush.msra.mxu0 %v241
        %270 = vmatpush.msra.mxu0 %v240
        %271 = vmatpush.msra.mxu0 %v239
        %272 = vmatpush.msra.mxu0 %v238
        %273 = vmatpush.msra.mxu0 %v237
        %274 = vmatpush.msra.mxu0 %v236
        %275 = vmatmul.f32.gmra.mxu0 %v257
        %v276 = vpop.f32.mrf.mxu0
        %v277 = vadd.f32 0.0, %v276
        %278 = vdwg.mxu0
        %v280 = vsel %vm255, %v222, 0
        %282 = vmatpush.msra.mxu0 0.0
        %283 = vmatpush.msra.mxu0 0.0
        %284 = vmatpush.msra.mxu0 0.0
        %285 = vmatpush.msra.mxu0 0.0
        %286 = vmatpush.msra.mxu0 0.0
        %287 = vmatpush.msra.mxu0 0.0
        %288 = vmatpush.msra.mxu0 0.0
        %289 = vmatpush.msra.mxu0 %v234
        %290 = vmatpush.msra.mxu0 %v233
        %291 = vmatpush.msra.mxu0 %v232
        %292 = vmatpush.msra.mxu0 %v231
        %293 = vmatpush.msra.mxu0 %v230
        %294 = vmatpush.msra.mxu0 %v229
        %295 = vmatpush.msra.mxu0 %v228
        %296 = vmatpush.msra.mxu0 %v227
        %297 = vmatpush.msra.mxu0 %v226
        %298 = vmatmul.f32.gmra.mxu0 %v280
        %v299 = vpop.f32.mrf.mxu0
        %v300 = vadd.f32 %v277, %v299
        %301 = vdwg.mxu0
        %vm303 = vcmask 1046528
        %v304 = vrot.slane %v222, 1
        %v305 = vrot.slane %v223, 1
        %v306 = vsel %vm303, %v304, %v305
        %v307 = vsel %vm255, %v306, 0
        %309 = vmatpush.msra.mxu0 0.0
        %310 = vmatpush.msra.mxu0 0.0
        %311 = vmatpush.msra.mxu0 0.0
        %312 = vmatpush.msra.mxu0 0.0
        %313 = vmatpush.msra.mxu0 0.0
        %314 = vmatpush.msra.mxu0 0.0
        %315 = vmatpush.msra.mxu0 0.0
        %316 = vmatpush.msra.mxu0 %v254
        %317 = vmatpush.msra.mxu0 %v253
        %318 = vmatpush.msra.mxu0 %v252
        %319 = vmatpush.msra.mxu0 %v251
        %320 = vmatpush.msra.mxu0 %v250
        %321 = vmatpush.msra.mxu0 %v249
        %322 = vmatpush.msra.mxu0 %v248
        %323 = vmatpush.msra.mxu0 %v247
        %324 = vmatpush.msra.mxu0 %v246
        %325 = vmatmul.f32.gmra.mxu0 %v307
        %v326 = vpop.f32.mrf.mxu0
        %v327 = vadd.f32 0.0, %v326
        %328 = vdwg.mxu0
        %v329 = vadd.f32 %v300, %v327
        %330 = vmatpush.msra.mxu0 0.0
        %331 = vmatpush.msra.mxu0 0.0
        %332 = vmatpush.msra.mxu0 0.0
        %333 = vmatpush.msra.mxu0 0.0
        %334 = vmatpush.msra.mxu0 0.0
        %335 = vmatpush.msra.mxu0 0.0
        %336 = vmatpush.msra.mxu0 0.0
        %337 = vmatpush.msra.mxu0 %v244
        %338 = vmatpush.msra.mxu0 %v243
        %339 = vmatpush.msra.mxu0 %v242
        %340 = vmatpush.msra.mxu0 %v241
        %341 = vmatpush.msra.mxu0 %v240
        %342 = vmatpush.msra.mxu0 %v239
        %343 = vmatpush.msra.mxu0 %v238
        %344 = vmatpush.msra.mxu0 %v237
        %345 = vmatpush.msra.mxu0 %v236
        %346 = vmatmul.f32.gmra.mxu0 %v307
        %v347 = vpop.f32.mrf.mxu0
        %v348 = vadd.f32 0.0, %v347
        %349 = vdwg.mxu0
        %350 = vmatpush.msra.mxu0 0.0
        %351 = vmatpush.msra.mxu0 0.0
        %352 = vmatpush.msra.mxu0 0.0
        %353 = vmatpush.msra.mxu0 0.0
        %354 = vmatpush.msra.mxu0 0.0
        %355 = vmatpush.msra.mxu0 0.0
        %356 = vmatpush.msra.mxu0 0.0
        %357 = vmatpush.msra.mxu0 %v234
        %358 = vmatpush.msra.mxu0 %v233
        %359 = vmatpush.msra.mxu0 %v232
        %360 = vmatpush.msra.mxu0 %v231
        %361 = vmatpush.msra.mxu0 %v230
        %362 = vmatpush.msra.mxu0 %v229
        %363 = vmatpush.msra.mxu0 %v228
        %364 = vmatpush.msra.mxu0 %v227
        %365 = vmatpush.msra.mxu0 %v226
        %366 = vmatmul.f32.gmra.mxu0 %v257
        %v367 = vpop.f32.mrf.mxu0
        %v368 = vadd.f32 %v348, %v367
        %369 = vdwg.mxu0
        %v371 = vrot.slane %v224, 1
        %v372 = vrot.slane %v225, 1
        %v373 = vsel %vm303, %v371, %v372
        %v374 = vsel %vm255, %v373, 0
        %376 = vmatpush.msra.mxu0 0.0
        %377 = vmatpush.msra.mxu0 0.0
        %378 = vmatpush.msra.mxu0 0.0
        %379 = vmatpush.msra.mxu0 0.0
        %380 = vmatpush.msra.mxu0 0.0
        %381 = vmatpush.msra.mxu0 0.0
        %382 = vmatpush.msra.mxu0 0.0
        %383 = vmatpush.msra.mxu0 %v254
        %384 = vmatpush.msra.mxu0 %v253
        %385 = vmatpush.msra.mxu0 %v252
        %386 = vmatpush.msra.mxu0 %v251
        %387 = vmatpush.msra.mxu0 %v250
        %388 = vmatpush.msra.mxu0 %v249
        %389 = vmatpush.msra.mxu0 %v248
        %390 = vmatpush.msra.mxu0 %v247
        %391 = vmatpush.msra.mxu0 %v246
        %392 = vmatmul.f32.gmra.mxu0 %v374
        %v393 = vpop.f32.mrf.mxu0
        %v394 = vadd.f32 0.0, %v393
        %395 = vdwg.mxu0
        %v396 = vadd.f32 %v368, %v394
        %v397 = vmax.f32 %v329, %v396
        %399 = vrot.lane.b32.xlu0 %v397, 64
        %v400 = vpop.permute.xlu0 %399
        %v402 = vmax.f32 %v397, %v400
        %v403 = vld [vmem:[%s2] sm:$0x1]
        %v405 = vperm.slane %v403, 0
        %v407 = vadd.f32 %v402, %v405
        %v408 = vmax.f32 %v407, 0.0
        %v409 = vld [vmem:[%s4] sm:$0x1]
        %v410 = vld [vmem:[%s3] sm:$0xff]
        %v411 = vld [vmem:[%s3 + $0x8] sm:$0xff]
        %v412 = vld [vmem:[%s3 + $0x10] sm:$0xff]
        %v413 = vld [vmem:[%s3 + $0x18] sm:$0xff]
        %v414 = vld [vmem:[%s3 + $0x20] sm:$0xff]
        %v415 = vld [vmem:[%s3 + $0x28] sm:$0xff]
        %v416 = vld [vmem:[%s3 + $0x30] sm:$0xff]
        %v417 = vld [vmem:[%s3 + $0x38] sm:$0xff]
        %vm418 = vcmask 523264
        %v420 = vsel %vm418, %v408, 0
        %422 = vmatpush.msra.mxu0 0.0
        %423 = vmatpush.msra.mxu0 0.0
        %424 = vmatpush.msra.mxu0 0.0
        %425 = vmatpush.msra.mxu0 0.0
        %426 = vmatpush.msra.mxu0 0.0
        %427 = vmatpush.msra.mxu0 0.0
        %428 = vmatpush.msra.mxu0 0.0
        %429 = vmatpush.msra.mxu0 0.0
        %430 = vmatpush.msra.mxu0 %v417
        %431 = vmatpush.msra.mxu0 %v416
        %432 = vmatpush.msra.mxu0 %v415
        %433 = vmatpush.msra.mxu0 %v414
        %434 = vmatpush.msra.mxu0 %v413
        %435 = vmatpush.msra.mxu0 %v412
        %436 = vmatpush.msra.mxu0 %v411
        %437 = vmatpush.msra.mxu0 %v410
        %438 = vmatmul.f32.gmra.mxu0 %v420
        %v439 = vpop.f32.mrf.mxu0
        %v440 = vadd.f32 0.0, %v439
        %441 = vdwg.mxu0
        %v442 = vadd.f32 %v409, %v440
        %v443 = vld [vmem:[%s3 + $0x40] sm:$0xff]
        %v444 = vld [vmem:[%s3 + $0x48] sm:$0xff]
        %v445 = vld [vmem:[%s3 + $0x50] sm:$0xff]
        %v446 = vld [vmem:[%s3 + $0x58] sm:$0xff]
        %v447 = vld [vmem:[%s3 + $0x60] sm:$0xff]
        %v448 = vld [vmem:[%s3 + $0x68] sm:$0xff]
        %v449 = vld [vmem:[%s3 + $0x70] sm:$0xff]
        %v450 = vld [vmem:[%s3 + $0x78] sm:$0xff]
        %v451 = vrot.slane %v408, 1
        %v452 = vsel %vm418, %v451, 0
        %454 = vmatpush.msra.mxu0 0.0
        %455 = vmatpush.msra.mxu0 0.0
        %456 = vmatpush.msra.mxu0 0.0
        %457 = vmatpush.msra.mxu0 0.0
        %458 = vmatpush.msra.mxu0 0.0
        %459 = vmatpush.msra.mxu0 0.0
        %460 = vmatpush.msra.mxu0 0.0
        %461 = vmatpush.msra.mxu0 0.0
        %462 = vmatpush.msra.mxu0 %v450
        %463 = vmatpush.msra.mxu0 %v449
        %464 = vmatpush.msra.mxu0 %v448
        %465 = vmatpush.msra.mxu0 %v447
        %466 = vmatpush.msra.mxu0 %v446
        %467 = vmatpush.msra.mxu0 %v445
        %468 = vmatpush.msra.mxu0 %v444
        %469 = vmatpush.msra.mxu0 %v443
        %470 = vmatmul.f32.gmra.mxu0 %v452
        %v471 = vpop.f32.mrf.mxu0
        %v472 = vadd.f32 0.0, %v471
        %473 = vdwg.mxu0
        %v474 = vadd.f32 %v442, %v472
        %v475 = vld [vmem:[%s3 + $0x80] sm:$0xff]
        %v476 = vld [vmem:[%s3 + $0x88] sm:$0xff]
        %v477 = vld [vmem:[%s3 + $0x90] sm:$0xff]
        %v478 = vld [vmem:[%s3 + $0x98] sm:$0xff]
        %v479 = vld [vmem:[%s3 + $0xa0] sm:$0xff]
        %v480 = vld [vmem:[%s3 + $0xa8] sm:$0xff]
        %v481 = vld [vmem:[%s3 + $0xb0] sm:$0xff]
        %v482 = vld [vmem:[%s3 + $0xb8] sm:$0xff]
        %v483 = vrot.slane %v408, 2
        %v484 = vsel %vm418, %v483, 0
        %486 = vmatpush.msra.mxu0 0.0
        %487 = vmatpush.msra.mxu0 0.0
        %488 = vmatpush.msra.mxu0 0.0
        %489 = vmatpush.msra.mxu0 0.0
        %490 = vmatpush.msra.mxu0 0.0
        %491 = vmatpush.msra.mxu0 0.0
        %492 = vmatpush.msra.mxu0 0.0
        %493 = vmatpush.msra.mxu0 0.0
        %494 = vmatpush.msra.mxu0 %v482
        %495 = vmatpush.msra.mxu0 %v481
        %496 = vmatpush.msra.mxu0 %v480
        %497 = vmatpush.msra.mxu0 %v479
        %498 = vmatpush.msra.mxu0 %v478
        %499 = vmatpush.msra.mxu0 %v477
        %500 = vmatpush.msra.mxu0 %v476
        %501 = vmatpush.msra.mxu0 %v475
        %502 = vmatmul.f32.gmra.mxu0 %v484
        %v503 = vpop.f32.mrf.mxu0
        %v504 = vadd.f32 0.0, %v503
        %505 = vdwg.mxu0
        %v506 = vadd.f32 %v474, %v504
        %v507 = vld [vmem:[%s3 + $0xc0] sm:$0xff]
        %v508 = vld [vmem:[%s3 + $0xc8] sm:$0xff]
        %v509 = vld [vmem:[%s3 + $0xd0] sm:$0xff]
        %v510 = vld [vmem:[%s3 + $0xd8] sm:$0xff]
        %v511 = vld [vmem:[%s3 + $0xe0] sm:$0xff]
        %v512 = vld [vmem:[%s3 + $0xe8] sm:$0xff]
        %v513 = vld [vmem:[%s3 + $0xf0] sm:$0xff]
        %v514 = vld [vmem:[%s3 + $0xf8] sm:$0xff]
        %v515 = vrot.slane %v408, 3
        %v516 = vsel %vm418, %v515, 0
        %518 = vmatpush.msra.mxu0 0.0
        %519 = vmatpush.msra.mxu0 0.0
        %520 = vmatpush.msra.mxu0 0.0
        %521 = vmatpush.msra.mxu0 0.0
        %522 = vmatpush.msra.mxu0 0.0
        %523 = vmatpush.msra.mxu0 0.0
        %524 = vmatpush.msra.mxu0 0.0
        %525 = vmatpush.msra.mxu0 0.0
        %526 = vmatpush.msra.mxu0 %v514
        %527 = vmatpush.msra.mxu0 %v513
        %528 = vmatpush.msra.mxu0 %v512
        %529 = vmatpush.msra.mxu0 %v511
        %530 = vmatpush.msra.mxu0 %v510
        %531 = vmatpush.msra.mxu0 %v509
        %532 = vmatpush.msra.mxu0 %v508
        %533 = vmatpush.msra.mxu0 %v507
        %534 = vmatmul.f32.gmra.mxu0 %v516
        %v535 = vpop.f32.mrf.mxu0
        %v536 = vadd.f32 0.0, %v535
        %537 = vdwg.mxu0
        %v538 = vadd.f32 %v506, %v536
        %v539 = vld [vmem:[%s3 + $0x100] sm:$0xff]
        %v540 = vld [vmem:[%s3 + $0x108] sm:$0xff]
        %v541 = vld [vmem:[%s3 + $0x110] sm:$0xff]
        %v542 = vld [vmem:[%s3 + $0x118] sm:$0xff]
        %v543 = vld [vmem:[%s3 + $0x120] sm:$0xff]
        %v544 = vld [vmem:[%s3 + $0x128] sm:$0xff]
        %v545 = vld [vmem:[%s3 + $0x130] sm:$0xff]
        %v546 = vld [vmem:[%s3 + $0x138] sm:$0xff]
        %v547 = vrot.slane %v408, 4
        %v548 = vsel %vm418, %v547, 0
        %550 = vmatpush.msra.mxu0 0.0
        %551 = vmatpush.msra.mxu0 0.0
        %552 = vmatpush.msra.mxu0 0.0
        %553 = vmatpush.msra.mxu0 0.0
        %554 = vmatpush.msra.mxu0 0.0
        %555 = vmatpush.msra.mxu0 0.0
        %556 = vmatpush.msra.mxu0 0.0
        %557 = vmatpush.msra.mxu0 0.0
        %558 = vmatpush.msra.mxu0 %v546
        %559 = vmatpush.msra.mxu0 %v545
        %560 = vmatpush.msra.mxu0 %v544
        %561 = vmatpush.msra.mxu0 %v543
        %562 = vmatpush.msra.mxu0 %v542
        %563 = vmatpush.msra.mxu0 %v541
        %564 = vmatpush.msra.mxu0 %v540
        %565 = vmatpush.msra.mxu0 %v539
        %566 = vmatmul.f32.gmra.mxu0 %v548
        %v567 = vpop.f32.mrf.mxu0
        %v568 = vadd.f32 0.0, %v567
        %569 = vdwg.mxu0
        %v570 = vadd.f32 %v538, %v568
        %v571 = vld [vmem:[%s3 + $0x140] sm:$0xff]
        %v572 = vld [vmem:[%s3 + $0x148] sm:$0xff]
        %v573 = vld [vmem:[%s3 + $0x150] sm:$0xff]
        %v574 = vld [vmem:[%s3 + $0x158] sm:$0xff]
        %v575 = vld [vmem:[%s3 + $0x160] sm:$0xff]
        %v576 = vld [vmem:[%s3 + $0x168] sm:$0xff]
        %v577 = vld [vmem:[%s3 + $0x170] sm:$0xff]
        %v578 = vld [vmem:[%s3 + $0x178] sm:$0xff]
        %v579 = vrot.slane %v408, 5
        %v580 = vsel %vm418, %v579, 0
        %582 = vmatpush.msra.mxu0 0.0
        %583 = vmatpush.msra.mxu0 0.0
        %584 = vmatpush.msra.mxu0 0.0
        %585 = vmatpush.msra.mxu0 0.0
        %586 = vmatpush.msra.mxu0 0.0
        %587 = vmatpush.msra.mxu0 0.0
        %588 = vmatpush.msra.mxu0 0.0
        %589 = vmatpush.msra.mxu0 0.0
        %590 = vmatpush.msra.mxu0 %v578
        %591 = vmatpush.msra.mxu0 %v577
        %592 = vmatpush.msra.mxu0 %v576
        %593 = vmatpush.msra.mxu0 %v575
        %594 = vmatpush.msra.mxu0 %v574
        %595 = vmatpush.msra.mxu0 %v573
        %596 = vmatpush.msra.mxu0 %v572
        %597 = vmatpush.msra.mxu0 %v571
        %598 = vmatmul.f32.gmra.mxu0 %v580
        %v599 = vpop.f32.mrf.mxu0
        %v600 = vadd.f32 0.0, %v599
        %601 = vdwg.mxu0
        %v602 = vadd.f32 %v570, %v600
        %v603 = vld [vmem:[%s3 + $0x180] sm:$0xff]
        %v604 = vld [vmem:[%s3 + $0x188] sm:$0xff]
        %v605 = vld [vmem:[%s3 + $0x190] sm:$0xff]
        %v606 = vld [vmem:[%s3 + $0x198] sm:$0xff]
        %v607 = vld [vmem:[%s3 + $0x1a0] sm:$0xff]
        %v608 = vld [vmem:[%s3 + $0x1a8] sm:$0xff]
        %v609 = vld [vmem:[%s3 + $0x1b0] sm:$0xff]
        %v610 = vld [vmem:[%s3 + $0x1b8] sm:$0xff]
        %v611 = vrot.slane %v408, 6
        %v612 = vsel %vm418, %v611, 0
        %614 = vmatpush.msra.mxu0 0.0
        %615 = vmatpush.msra.mxu0 0.0
        %616 = vmatpush.msra.mxu0 0.0
        %617 = vmatpush.msra.mxu0 0.0
        %618 = vmatpush.msra.mxu0 0.0
        %619 = vmatpush.msra.mxu0 0.0
        %620 = vmatpush.msra.mxu0 0.0
        %621 = vmatpush.msra.mxu0 0.0
        %622 = vmatpush.msra.mxu0 %v610
        %623 = vmatpush.msra.mxu0 %v609
        %624 = vmatpush.msra.mxu0 %v608
        %625 = vmatpush.msra.mxu0 %v607
        %626 = vmatpush.msra.mxu0 %v606
        %627 = vmatpush.msra.mxu0 %v605
        %628 = vmatpush.msra.mxu0 %v604
        %629 = vmatpush.msra.mxu0 %v603
        %630 = vmatmul.f32.gmra.mxu0 %v612
        %v631 = vpop.f32.mrf.mxu0
        %v632 = vadd.f32 0.0, %v631
        %633 = vdwg.mxu0
        %v634 = vadd.f32 %v602, %v632
        %v635 = vld [vmem:[%s3 + $0x1c0] sm:$0xff]
        %v636 = vld [vmem:[%s3 + $0x1c8] sm:$0xff]
        %v637 = vld [vmem:[%s3 + $0x1d0] sm:$0xff]
        %v638 = vld [vmem:[%s3 + $0x1d8] sm:$0xff]
        %v639 = vld [vmem:[%s3 + $0x1e0] sm:$0xff]
        %v640 = vld [vmem:[%s3 + $0x1e8] sm:$0xff]
        %v641 = vld [vmem:[%s3 + $0x1f0] sm:$0xff]
        %v642 = vld [vmem:[%s3 + $0x1f8] sm:$0xff]
        %v643 = vrot.slane %v408, 7
        %v644 = vsel %vm418, %v643, 0
        %646 = vmatpush.msra.mxu0 0.0
        %647 = vmatpush.msra.mxu0 0.0
        %648 = vmatpush.msra.mxu0 0.0
        %649 = vmatpush.msra.mxu0 0.0
        %650 = vmatpush.msra.mxu0 0.0
        %651 = vmatpush.msra.mxu0 0.0
        %652 = vmatpush.msra.mxu0 0.0
        %653 = vmatpush.msra.mxu0 0.0
        %654 = vmatpush.msra.mxu0 %v642
        %655 = vmatpush.msra.mxu0 %v641
        %656 = vmatpush.msra.mxu0 %v640
        %657 = vmatpush.msra.mxu0 %v639
        %658 = vmatpush.msra.mxu0 %v638
        %659 = vmatpush.msra.mxu0 %v637
        %660 = vmatpush.msra.mxu0 %v636
        %661 = vmatpush.msra.mxu0 %v635
        %662 = vmatmul.f32.gmra.mxu0 %v644
        %v663 = vpop.f32.mrf.mxu0
        %v664 = vadd.f32 0.0, %v663
        %665 = vdwg.mxu0
        %v666 = vadd.f32 %v634, %v664
        %vm667 = vcmask 73728
        %668 = vst.msk [vmem:[%s216] sm:$0x1] %vm667, %v666
        %s669 = sand.u32 %s137, 1
        %s670 = scalar_lea.sflag [#allocation3], %s669
        %s671 = sand.u32 %s137, 1
        %s672 = scalar_lea.vmem [#allocation2], %s671
        // Predicated region
        $region41: #{flat_model_forward.1} parent=39 // pred_check
          %p673 = pneg %p147
        $region42: #{flat_model_forward.1} parent=39 // pred_check_branch
          %675 = sbr.rel (%p673) target = $region44
        $region43: #{flat_model_forward.1} parent=39 // pred_region
          %677 = vsyncadd %s670, 0
          %s678 = scalar_lea.hbm %s5, %s19
          %s680 = sshll.u32 %s672, 4
          %s681 = int_to_ptr.vmem [resolvable:$true] %s680
          %s682 = sshll.u32 %s678, 4
          %s683 = int_to_ptr.hbm [resolvable:$true] %s682
          %685 = dma.vmem_to_hbm [thread:$0]  %s681, 16, %s683, %s670
        $region44: #{flat_model_forward.1} parent=39 // pred_fallthru
          _
      $region40: #{flat_model_forward.1} parent=5 // pred_fallthru
        _
      %p686 = scmp.le.s32.totalorder 2, %s14
      // Predicated region
      $region45: #{flat_model_forward.1} parent=5 // pred_check
        %p687 = pneg %p686
      $region46: #{flat_model_forward.1} parent=5 // pred_check_branch
        %689 = sbr.rel (%p687) target = $region48
      $region47: #{flat_model_forward.1} parent=5 // pred_region
        %s690 = ssub.s32 %s14, 2
        // Predicated region
        $region49: #{flat_model_forward.1} parent=47 // pred_check
          %p691 = pneg %p153
        $region50: #{flat_model_forward.1} parent=47 // pred_check_branch
          %693 = sbr.rel (%p691) target = $region52
        $region51: #{flat_model_forward.1} parent=47 // pred_region
          %s694 = sand.u32 %s138, 1
          %s695 = scalar_lea.sflag [#allocation3], %s694
          %s696 = sand.u32 %s138, 1
          %s697 = scalar_lea.vmem [#allocation2], %s696
          %699 = dma.done %s695, 16
        $region52: #{flat_model_forward.1} parent=47 // pred_fallthru
          _
      $region48: #{flat_model_forward.1} parent=5 // pred_fallthru
        _
    $region6: #{flat_model_forward.1} parent=1 // loop_footer
      %s18 = sadd.s32 1, %s14
    $region7: #{flat_model_forward.1} parent=1 // loop_footer_branch
      %13 = sbr.rel target = $region3
    $region8: #{flat_model_forward.1} parent=1 // loop_exit
      _
    %700 = vsyncpa [#allocation3], 1
    %s701 = scalar_lea.sflag [#allocation3], 1
    %702 = vsyncpa %s701, 1

</llo_original>
